<compile_context>
chip_gen: v7x
topology: tpu7x:2x2x1
jax: 0.10.0
libtpu: 0.0.40
codegen_flags: <defaults>
</compile_context>

<pallas_src>
import numpy as np
import jax
import jax.numpy as jnp
from jax.experimental import pallas as pl
from jax.experimental.pallas import tpu as pltpu


def calculate_birds_eye_view_parameters(x_bounds, y_bounds, z_bounds):
    bev_resolution = np.array([row[2] for row in [x_bounds, y_bounds, z_bounds]],
                              dtype=np.float64)
    bev_start_position = np.array([row[0] for row in [x_bounds, y_bounds, z_bounds]],
                                  dtype=np.float64)
    bev_dimension = np.array([(row[1] - row[0]) / row[2]
                              for row in [x_bounds, y_bounds, z_bounds]], dtype=np.int64)
    return bev_resolution, bev_start_position, bev_dimension


def _bilinear_weight_matrix(norm_coords, size):
    """(M, size) bilinear interpolation matrix for normalized coords.

    Matches F.grid_sample semantics with mode='bilinear', align_corners=True,
    padding_mode='zeros' (out-of-range taps contribute zero).
    """
    px = (norm_coords + 1.0) * 0.5 * (size - 1)          # align_corners=True mapping
    p0 = np.floor(px).astype(np.int64)
    p1 = p0 + 1
    w1 = (px - p0).astype(np.float32)
    w0 = 1.0 - w1
    m = norm_coords.shape[0]
    W = np.zeros((m, size), dtype=np.float32)
    rows = np.arange(m)
    v0 = (p0 >= 0) & (p0 < size)
    v1 = (p1 >= 0) & (p1 < size)
    W[rows[v0], p0[v0]] += w0[v0]
    W[rows[v1], p1[v1]] += w1[v1]
    return W


def _round_up(x, m):
    return ((x + m - 1) // m) * m


def _vmem_limit_bytes():
    """Generation-aware VMEM limit: ~48 MiB on v7x (64 MiB physical VMEM),
    ~96 MiB on v5e/v6e (128 MiB). Conservative fallback if the query fails."""
    cap = 64 << 20
    try:
        info = pltpu.get_tpu_info()
        cap = int(getattr(info, "vmem_capacity_bytes", cap))
    except Exception:
        pass
    return int(min(max(cap - (16 << 20), 16 << 20), 96 << 20))


def _choose_channel_block(nc, h_in_p, w_in, h_out_p, w_out, itemsize, vmem_limit):
    """Channels per grid step, sized from the real per-step VMEM footprint."""
    in_blk = h_in_p * w_in * itemsize * 2            # double-buffered input rows
    out_blk = h_out_p * w_out * itemsize * 2         # double-buffered output rows
    inter = h_in_p * h_out_p * 4 * 2 + h_out_p * w_out * 4   # f32 u, u^T, result
    per_chan = in_blk + out_blk + inter
    weights = (w_in * h_out_p + h_in_p * w_out) * itemsize * 2
    budget = int(vmem_limit * 0.7) - weights
    cap = max(1, budget // max(per_chan, 1))
    if nc >= 4:
        # >= 4 grid steps: each of v7x's two TensorCores keeps >= 2 steps so the
        # prefetch/writeback pipeline stays alive per core.
        cap = min(cap, max(1, nc // 4))
    cap = int(min(cap, nc))
    # Prefer a divisor of nc (no channel padding copy) unless it is much smaller
    # than the VMEM budget allows; otherwise pad nc up to a block multiple.
    best_div = 1
    for cand in range(1, cap + 1):
        if nc % cand == 0:
            best_div = cand
    c_blk = best_div if best_div * 2 >= cap else cap
    nc_pad = _round_up(nc, c_blk)
    return c_blk, nc_pad


def _slicer_kernel(x_ref, at_ref, bt_ref, o_ref):
    """One channel block of separable bilinear resampling.

    x_ref : (C_blk*H_in_p,  W_in)    flattened input rows for C_blk channels
    at_ref: (W_in,          H_out_p) A^T -- bilinear weights along input width
    bt_ref: (H_in_p,        W_out)   B^T -- bilinear weights along input height
    o_ref : (C_blk*H_out_p, W_out)   flattened output rows for C_blk channels
    """
    h_in_p = bt_ref.shape[0]
    h_out_p = at_ref.shape[1]
    c_blk = x_ref.shape[0] // h_in_p

    # Stage 1: width resampling for the whole channel block as ONE wide matmul.
    u = jnp.dot(x_ref[...], at_ref[...],
                preferred_element_type=jnp.float32)        # (C_blk*H_in_p, H_out_p)

    # Per-channel (H_in, H_out) transpose, expressed once for the whole block.
    # h_in_p / h_out_p are multiples of 8, so both reshapes are layout-preserving.
    u3 = u.reshape(c_blk, h_in_p, h_out_p)
    ut = jnp.swapaxes(u3, 1, 2)                             # (C_blk, H_out_p, H_in_p)
    u2 = ut.reshape(c_blk * h_out_p, h_in_p).astype(bt_ref.dtype)

    # Stage 2: height resampling, again ONE wide matmul, one whole-block store.
    out = jnp.dot(u2, bt_ref[...], preferred_element_type=jnp.float32)
    o_ref[...] = out.astype(o_ref.dtype)


class BevFeatureSlicer:
    def __init__(self, grid_conf, map_grid_conf):
        if grid_conf == map_grid_conf:
            self.identity_mapping = True
            return
        self.identity_mapping = False
        _, bev_start, _ = calculate_birds_eye_view_parameters(
            grid_conf['xbound'], grid_conf['ybound'], grid_conf['zbound'])
        map_res, map_start, _ = calculate_birds_eye_view_parameters(
            map_grid_conf['xbound'], map_grid_conf['ybound'], map_grid_conf['zbound'])
        map_x = np.arange(map_start[0], map_grid_conf['xbound'][1], map_res[0])
        map_y = np.arange(map_start[1], map_grid_conf['ybound'][1], map_res[1])
        # grid[..., 0] = norm_map_x[i] -> samples along input WIDTH
        # grid[..., 1] = norm_map_y[j] -> samples along input HEIGHT
        self.norm_map_x = (map_x / -bev_start[0]).astype(np.float64)
        self.norm_map_y = (map_y / -bev_start[1]).astype(np.float64)
        self.h_out = self.norm_map_x.shape[0]
        self.w_out = self.norm_map_y.shape[0]
        # Cache of padded, pre-transposed, pre-cast interpolation matrices keyed
        # by the input spatial size and compute dtype (built once, reused).
        self._weight_cache = {}
        self._vmem_limit = _vmem_limit_bytes()

    def _get_weights(self, h_in, w_in, dtype):
        key = (h_in, w_in, jnp.dtype(dtype).name)
        if key not in self._weight_cache:
            h_in_p = _round_up(h_in, 8)
            h_out_p = _round_up(self.h_out, 8)
            A = _bilinear_weight_matrix(self.norm_map_x, w_in)     # (H_out, W_in)
            B = _bilinear_weight_matrix(self.norm_map_y, h_in)     # (W_out, H_in)
            a_t = np.zeros((w_in, h_out_p), dtype=np.float32)      # zero-padded rows
            a_t[:, :self.h_out] = A.T
            b_t = np.zeros((h_in_p, self.w_out), dtype=np.float32)
            b_t[:h_in, :] = B.T
            np_dt = jnp.dtype(dtype)
            self._weight_cache[key] = (jnp.asarray(a_t.astype(np_dt)),
                                       jnp.asarray(b_t.astype(np_dt)),
                                       h_in_p, h_out_p)
        return self._weight_cache[key]

    def __call__(self, x):
        if self.identity_mapping:
            return x
        n, c, h_in, w_in = x.shape
        nc = n * c
        h_out, w_out = self.h_out, self.w_out
        a_t, b_t, h_in_p, h_out_p = self._get_weights(h_in, w_in, x.dtype)
        itemsize = jnp.dtype(x.dtype).itemsize

        c_blk, nc_pad = _choose_channel_block(
            nc, h_in_p, w_in, h_out_p, w_out, itemsize, self._vmem_limit)

        # Wrapper-side layout plumbing only. Reshapes are free metadata ops;
        # pads are emitted only when channel count / input height require them.
        x3 = x.reshape(nc, h_in, w_in)
        if nc_pad != nc or h_in_p != h_in:
            x3 = jnp.pad(x3, ((0, nc_pad - nc), (0, h_in_p - h_in), (0, 0)))
        x2 = x3.reshape(nc_pad * h_in_p, w_in)

        out2 = pl.pallas_call(
            _slicer_kernel,
            out_shape=jax.ShapeDtypeStruct((nc_pad * h_out_p, w_out), x.dtype),
            grid_spec=pltpu.PrefetchScalarGridSpec(
                num_scalar_prefetch=0,
                grid=(nc_pad // c_blk,),
                in_specs=[
                    pl.BlockSpec((c_blk * h_in_p, w_in), lambda i: (i, 0)),
                    pl.BlockSpec((w_in, h_out_p), lambda i: (0, 0)),
                    pl.BlockSpec((h_in_p, w_out), lambda i: (0, 0)),
                ],
                out_specs=pl.BlockSpec((c_blk * h_out_p, w_out), lambda i: (i, 0)),
            ),
            compiler_params=pltpu.CompilerParams(
                dimension_semantics=("parallel",),
                vmem_limit_bytes=self._vmem_limit,
            ),
        )(x2, a_t, b_t)

        out3 = out2.reshape(nc_pad, h_out_p, w_out)
        if nc_pad != nc or h_out_p != h_out:
            out3 = out3[:nc, :h_out, :]
        return out3.reshape(n, c, h_out, w_out)


def _grid_sample_reference(x, norm_x, norm_y):
    """Direct loop re-implementation of F.grid_sample(x, grid, mode='bilinear',
    align_corners=True, padding_mode='zeros') with grid[i, j] = (norm_x[i], norm_y[j]).
    Independent of the separable-matmul formulation used by the kernel."""
    n, c, h, w = x.shape
    h_out, w_out = len(norm_x), len(norm_y)
    out = np.zeros((n, c, h_out, w_out), dtype=np.float64)
    for i in range(h_out):
        px = (norm_x[i] + 1.0) * 0.5 * (w - 1)       # x-coord -> input width
        x0 = int(np.floor(px)); x1 = x0 + 1
        wx1 = px - x0; wx0 = 1.0 - wx1
        for j in range(w_out):
            py = (norm_y[j] + 1.0) * 0.5 * (h - 1)   # y-coord -> input height
            y0 = int(np.floor(py)); y1 = y0 + 1
            wy1 = py - y0; wy0 = 1.0 - wy1
            acc = np.zeros((n, c), dtype=np.float64)
            for yy, wy in ((y0, wy0), (y1, wy1)):
                for xx, wx in ((x0, wx0), (x1, wx1)):
                    if 0 <= yy < h and 0 <= xx < w:
                        acc += wy * wx * x[:, :, yy, xx]
            out[:, :, i, j] = acc
    return out


if __name__ == "__main__":
    # Source BEV grid: 16 x 16 cells over [-8, 8] m at 1 m resolution.
    grid_conf = {
        'xbound': [-8.0, 8.0, 1.0],
        'ybound': [-8.0, 8.0, 1.0],
        'zbound': [-5.0, 3.0, 8.0],
    }
    # Target (map) BEV grid: 12 x 12 cells over [-6, 6] m at 1 m resolution.
    map_grid_conf = {
        'xbound': [-6.0, 6.0, 1.0],
        'ybound': [-6.0, 6.0, 1.0],
        'zbound': [-5.0, 3.0, 8.0],
    }

    slicer = BevFeatureSlicer(grid_conf, map_grid_conf)

    key = jax.random.PRNGKey(0)
    k1, k2 = jax.random.split(key)
    x = jax.random.normal(k1, (2, 4, 16, 16), dtype=jnp.float32)   # NCHW

    out = jax.block_until_ready(slicer(x))
    assert out.shape == (2, 4, 12, 12), out.shape

    # Reference: direct grid_sample-style bilinear sampling (independent of the
    # kernel's A/B matrix formulation -> catches any x/y orientation mix-up).
    # Tolerance 1e-3 allows for MXU matmul rounding; structural bugs would be O(1).
    ref = _grid_sample_reference(np.asarray(x, dtype=np.float64),
                                 slicer.norm_map_x, slicer.norm_map_y)
    np.testing.assert_allclose(np.asarray(out), ref, rtol=1e-3, atol=1e-3)

    # Second call hits the cached (padded, pre-transposed) weight matrices.
    out2 = jax.block_until_ready(slicer(x))
    np.testing.assert_allclose(np.asarray(out2), ref, rtol=1e-3, atol=1e-3)

    # Unaligned input height (12 -> padded to 16 in the wrapper / weights)
    # exercises the padding path of the same kernel.
    x_odd = jax.random.normal(k2, (2, 4, 12, 24), dtype=jnp.float32)
    out_odd = jax.block_until_ready(slicer(x_odd))
    assert out_odd.shape == (2, 4, 12, 12), out_odd.shape
    ref_odd = _grid_sample_reference(np.asarray(x_odd, dtype=np.float64),
                                     slicer.norm_map_x, slicer.norm_map_y)
    np.testing.assert_allclose(np.asarray(out_odd), ref_odd, rtol=1e-3, atol=1e-3)

    # Identity-mapping branch (grid_conf == map_grid_conf) returns input as-is.
    ident = BevFeatureSlicer(grid_conf, grid_conf)
    assert ident(x) is x

    print("KERNEL_OK")
</pallas_src>

<mosaic_0001>
module attributes {stable_mosaic.version = 11 : i64} {
  func.func @_slicer_kernel(%arg0: i32, %arg1: memref<32x16xf32, #tpu.memory_space<vmem>>, %arg2: memref<16x16xf32, #tpu.memory_space<vmem>>, %arg3: memref<16x12xf32, #tpu.memory_space<vmem>>, %arg4: memref<32x12xf32, #tpu.memory_space<vmem>>) attributes {dimension_semantics = [#tpu.dimension_semantics<parallel>], iteration_bounds = array<i64: 4>, scalar_prefetch = 0 : i64, scratch_operands = 0 : i64, tpu.core_type = #tpu.core_type<tc>, window_params = [{transform_indices = @transform_0, window_bounds = array<i64: 32, 16>}, {pipeline_mode = #tpu.pipeline_mode<synchronous>, transform_indices = @transform_1, window_bounds = array<i64: 16, 16>}, {pipeline_mode = #tpu.pipeline_mode<synchronous>, transform_indices = @transform_2, window_bounds = array<i64: 16, 12>}, {transform_indices = @transform_3, window_bounds = array<i64: 32, 12>}]} {
    %c0 = arith.constant 0 : index
    %c0_0 = arith.constant 0 : index
    %0 = vector.load %arg1[%c0, %c0_0] : memref<32x16xf32, #tpu.memory_space<vmem>>, vector<32x16xf32>
    %c0_1 = arith.constant 0 : index
    %c0_2 = arith.constant 0 : index
    %1 = vector.load %arg2[%c0_1, %c0_2] : memref<16x16xf32, #tpu.memory_space<vmem>>, vector<16x16xf32>
    %cst = arith.constant dense<0.000000e+00> : vector<32x16xf32>
    %2 = tpu.matmul %0, %1, %cst {dimension_numbers = #tpu.dot_dimension_numbers<[1], [0], [0], [1], [0, 0, 1, 1], [], []>} : vector<32x16xf32>, vector<16x16xf32>, vector<32x16xf32> -> vector<32x16xf32>
    %3 = vector.shape_cast %2 : vector<32x16xf32> to vector<2x16x16xf32>
    %4 = tpu.transpose %3, [0, 2, 1] : vector<2x16x16xf32> -> vector<2x16x16xf32>
    %5 = vector.shape_cast %4 : vector<2x16x16xf32> to vector<32x16xf32>
    %c0_3 = arith.constant 0 : index
    %c0_4 = arith.constant 0 : index
    %6 = vector.load %arg3[%c0_3, %c0_4] : memref<16x12xf32, #tpu.memory_space<vmem>>, vector<16x12xf32>
    %cst_5 = arith.constant dense<0.000000e+00> : vector<32x12xf32>
    %7 = tpu.matmul %5, %6, %cst_5 {dimension_numbers = #tpu.dot_dimension_numbers<[1], [0], [0], [1], [0, 0, 1, 1], [], []>} : vector<32x16xf32>, vector<16x12xf32>, vector<32x12xf32> -> vector<32x12xf32>
    %c0_6 = arith.constant 0 : index
    %c0_7 = arith.constant 0 : index
    %8 = vector.load %arg4[%c0_6, %c0_7] : memref<32x12xf32, #tpu.memory_space<vmem>>, vector<32x12xf32>
    tpu.vector_store %arg4[%c0_6, %c0_7], %7 {strides = array<i32>} : memref<32x12xf32, #tpu.memory_space<vmem>>, vector<32x12xf32>,
    return
  }
  func.func @transform_0(%arg0: i32) -> (i32, i32) {
    %c0_i32 = arith.constant 0 : i32
    %c0_i32_0 = arith.constant 0 : i32
    return %arg0, %c0_i32 : i32, i32
  }
  func.func @transform_1(%arg0: i32) -> (i32, i32) {
    %c0_i32 = arith.constant 0 : i32
    %c0_i32_0 = arith.constant 0 : i32
    %c0_i32_1 = arith.constant 0 : i32
    return %c0_i32, %c0_i32_0 : i32, i32
  }
  func.func @transform_2(%arg0: i32) -> (i32, i32) {
    %c0_i32 = arith.constant 0 : i32
    %c0_i32_0 = arith.constant 0 : i32
    %c0_i32_1 = arith.constant 0 : i32
    return %c0_i32, %c0_i32_0 : i32, i32
  }
  func.func @transform_3(%arg0: i32) -> (i32, i32) {
    %c0_i32 = arith.constant 0 : i32
    %c0_i32_0 = arith.constant 0 : i32
    return %arg0, %c0_i32 : i32, i32
  }
}

</mosaic_0001>

<llo_original>
// kernel: tpu_custom_call.1
$region0: #{tpu_custom_call.1}
  #allocation0 [shape = 'u32[]', space=smem, size = 0x4, offset = 0x4, fixed_abs, tag = 'smem constant byte address 0x4 - core index']
  #allocation1 [shape = 'u32[144,128]{1,0:T(1,128)}', space=vmem, size = 0x12000, scoped, tag = 'internal scratch']
  %s0 = inlined_call_operand.vmem [shape: f32[128,16], index: 0, kind: input, shape index: {}]
  %s1 = inlined_call_operand.vmem [shape: f32[16,16], index: 1, kind: input, shape index: {}]
  %s2 = inlined_call_operand.vmem [shape: f32[16,12], index: 2, kind: input, shape index: {}]
  %s3 = inlined_call_operand.vmem [shape: f32[128,12], index: 3, kind: output, shape index: {}]
  %s4 = sld [smem:[#allocation0]]
  $region45: #{tpu_custom_call.1} parent=0
    _
  %s6 = ssub.s32 1, %s4
  %s7 = scalar_select 0, %s6, %s4
  loop: start=0, step=1, limit=6
  $region2: #{tpu_custom_call.1} parent=0 // loop_pre_header
    _
  $region3: #{tpu_custom_call.1} parent=0 // loop_header
    %s9 = sphi 0, %s13
    %p10 = scmp.ge.s32.totalorder %s9, 6
    %s19 = sphi 0, %s21
    %s22 = sphi 0, %s19
    %s23 = sphi 0, %s22
    %s39 = sphi 0, %s23
    %s43 = sphi 0, %s43
    %s45 = sphi 0, %s43
    %s46 = sphi 0, %s45
    %s60 = sphi 0, %s46
    %s64 = sphi 0, %s64
    %s66 = sphi 0, %s64
    %s67 = sphi 0, %s66
    %s81 = sphi 0, %s67
    %s87 = sphi 0, %s89
    %s90 = sphi 0, %s87
    %s91 = sphi 0, %s90
    %s107 = sphi 0, %s91
  $region4: #{tpu_custom_call.1} parent=0 // loop_header_branch
    %12 = sbr.rel (%p10) target = $region8
  $region5: #{tpu_custom_call.1} parent=0 // loop_body
    %s14 = ssub.s32 %s9, 1
    %s15 = ssub.s32 %s9, 2
    %s16 = sadd.s32 %s9, 1
    %s17 = ssub.s32 %s9, %s16
    %p18 = scmp.eq.s32.totalorder %s17, 0
    %s20 = sadd.s32 %s19, 1
    %s21 = scalar_select %p18, %s19, %s20
    %p24 = pneg %p18
    %p25 = scmp.eq.s32.totalorder %s9, 3
    %p26 = por %p24, %p25
    %p27 = scmp.ne.s32.totalorder %s19, %s22
    %p28 = scmp.eq.s32.totalorder %s9, 0
    %p29 = por %p27, %p28
    %p30 = scmp.ne.s32.totalorder %s19, %s22
    %p31 = scmp.eq.s32.totalorder %s14, 3
    %p32 = por %p30, %p31
    %p33 = scmp.ne.s32.totalorder %s22, %s23
    %p34 = scmp.eq.s32.totalorder %s14, 0
    %p35 = por %p33, %p34
    %p36 = scmp.ne.s32.totalorder %s22, %s23
    %p37 = scmp.eq.s32.totalorder %s15, 3
    %p38 = por %p36, %p37
    %p40 = scmp.ne.s32.totalorder %s23, %s39
    %p41 = scmp.eq.s32.totalorder %s15, 0
    %p42 = por %p40, %p41
    %s44 = sadd.s32 %s43, 1
    %p47 = scmp.eq.s32.totalorder %s9, 3
    %p48 = scmp.ne.s32.totalorder %s43, %s45
    %p49 = scmp.eq.s32.totalorder %s9, 0
    %p50 = por %p48, %p49
    %p51 = scmp.ne.s32.totalorder %s43, %s45
    %p52 = scmp.eq.s32.totalorder %s14, 3
    %p53 = por %p51, %p52
    %p54 = scmp.ne.s32.totalorder %s45, %s46
    %p55 = scmp.eq.s32.totalorder %s14, 0
    %p56 = por %p54, %p55
    %p57 = scmp.ne.s32.totalorder %s45, %s46
    %p58 = scmp.eq.s32.totalorder %s15, 3
    %p59 = por %p57, %p58
    %p61 = scmp.ne.s32.totalorder %s46, %s60
    %p62 = scmp.eq.s32.totalorder %s15, 0
    %p63 = por %p61, %p62
    %s65 = sadd.s32 %s64, 1
    %p68 = scmp.eq.s32.totalorder %s9, 3
    %p69 = scmp.ne.s32.totalorder %s64, %s66
    %p70 = scmp.eq.s32.totalorder %s9, 0
    %p71 = por %p69, %p70
    %p72 = scmp.ne.s32.totalorder %s64, %s66
    %p73 = scmp.eq.s32.totalorder %s14, 3
    %p74 = por %p72, %p73
    %p75 = scmp.ne.s32.totalorder %s66, %s67
    %p76 = scmp.eq.s32.totalorder %s14, 0
    %p77 = por %p75, %p76
    %p78 = scmp.ne.s32.totalorder %s66, %s67
    %p79 = scmp.eq.s32.totalorder %s15, 3
    %p80 = por %p78, %p79
    %p82 = scmp.ne.s32.totalorder %s67, %s81
    %p83 = scmp.eq.s32.totalorder %s15, 0
    %p84 = por %p82, %p83
    %s85 = ssub.s32 %s9, %s16
    %p86 = scmp.eq.s32.totalorder %s85, 0
    %s88 = sadd.s32 %s87, 1
    %s89 = scalar_select %p86, %s87, %s88
    %p92 = pneg %p86
    %p93 = scmp.eq.s32.totalorder %s9, 3
    %p94 = por %p92, %p93
    %p95 = scmp.ne.s32.totalorder %s87, %s90
    %p96 = scmp.eq.s32.totalorder %s9, 0
    %p97 = por %p95, %p96
    %p98 = scmp.ne.s32.totalorder %s87, %s90
    %p99 = scmp.eq.s32.totalorder %s14, 3
    %p100 = por %p98, %p99
    %p101 = scmp.ne.s32.totalorder %s90, %s91
    %p102 = scmp.eq.s32.totalorder %s14, 0
    %p103 = por %p101, %p102
    %p104 = scmp.ne.s32.totalorder %s90, %s91
    %p105 = scmp.eq.s32.totalorder %s15, 3
    %p106 = por %p104, %p105
    %p108 = scmp.ne.s32.totalorder %s91, %s107
    %p109 = scmp.eq.s32.totalorder %s15, 0
    %p110 = por %p108, %p109
    %p111 = scmp.le.s32.totalorder 1, %s9
    %p112 = scmp.lt.s32.totalorder %s9, 5
    %p113 = pnand %p111, %p112
    %p114 = pneg %p113
    // Predicated region
    $region9: #{tpu_custom_call.1} parent=5 // pred_check
      _
    $region10: #{tpu_custom_call.1} parent=5 // pred_check_branch
      %116 = sbr.rel (%p113) target = $region12
    $region11: #{tpu_custom_call.1} parent=5 // pred_region
      %s117 = ssub.s32 %s9, 1
      // Predicated region
      $region13: #{tpu_custom_call.1} parent=11 // pred_check
        %p118 = pneg %p56
      $region14: #{tpu_custom_call.1} parent=11 // pred_check_branch
        %120 = sbr.rel (%p118) target = $region16
      $region15: #{tpu_custom_call.1} parent=11 // pred_region
        _
      $region16: #{tpu_custom_call.1} parent=11 // pred_fallthru
        _
      // Predicated region
      $region17: #{tpu_custom_call.1} parent=11 // pred_check
        %p121 = pneg %p77
      $region18: #{tpu_custom_call.1} parent=11 // pred_check_branch
        %123 = sbr.rel (%p121) target = $region20
      $region19: #{tpu_custom_call.1} parent=11 // pred_region
        _
      $region20: #{tpu_custom_call.1} parent=11 // pred_fallthru
        _
    $region12: #{tpu_custom_call.1} parent=5 // pred_fallthru
      _
    %p124 = scmp.lt.s32.totalorder %s9, 4
    // Predicated region
    $region21: #{tpu_custom_call.1} parent=5 // pred_check
      %p125 = pneg %p124
    $region22: #{tpu_custom_call.1} parent=5 // pred_check_branch
      %127 = sbr.rel (%p125) target = $region24
    $region23: #{tpu_custom_call.1} parent=5 // pred_region
      // Predicated region
      $region25: #{tpu_custom_call.1} parent=23 // pred_check
        %p128 = pneg %p29
      $region26: #{tpu_custom_call.1} parent=23 // pred_check_branch
        %130 = sbr.rel (%p128) target = $region28
      $region27: #{tpu_custom_call.1} parent=23 // pred_region
        %s131 = smul.u32 4, %s9
        %p132 = scmp.lt.s32.totalorder %s131, 15
        %s133 = scalar_select %p132, %s131, 15
        %s134 = smul.addr %s133, 8
        %s135 = scalar_lea.vmem %s0, %s134
        %s136 = smul.u32 4, %s9
      $region28: #{tpu_custom_call.1} parent=23 // pred_fallthru
        _
    $region24: #{tpu_custom_call.1} parent=5 // pred_fallthru
      _
    %p137 = scmp.le.s32.totalorder 1, %s9
    %p138 = scmp.lt.s32.totalorder %s9, 5
    %p139 = pnand %p137, %p138
    %p140 = pneg %p139
    // Predicated region
    $region29: #{tpu_custom_call.1} parent=5 // pred_check
      _
    $region30: #{tpu_custom_call.1} parent=5 // pred_check_branch
      %142 = sbr.rel (%p139) target = $region32
    $region31: #{tpu_custom_call.1} parent=5 // pred_region
      %s143 = ssub.s32 %s9, 1
      %s144 = smul.u32 4, %s14
      %p145 = scmp.lt.s32.totalorder %s144, 15
      %s146 = scalar_select %p145, %s144, 15
      %s147 = smul.addr %s146, 8
      %s148 = scalar_lea.vmem %s0, %s147
      %p149 = pneg %p35
      %p150 = pneg %p32
      %p151 = pneg %p56
      %p152 = pneg %p53
      %p153 = pneg %p77
      %p154 = pneg %p74
      %p155 = pneg %p103
      %p156 = pneg %p100
      %s157 = smul.u32 4, %s14
      %p158 = scmp.lt.s32.totalorder %s157, 15
      %s159 = scalar_select %p158, %s157, 15
      %s160 = smul.addr %s159, 8
      %s161 = scalar_lea.vmem %s3, %s160
      %s162 = smul.u32 4, %s14
      %p163 = scmp.lt.s32.totalorder %s162, 15
      %s164 = scalar_select %p163, %s162, 15
      %s165 = smul.addr %s164, 8
      %s166 = scalar_lea.vmem %s0, %s165
      %s167 = smul.u32 4, %s14
      %s168 = smul.u32 4, %s14
      %p169 = scmp.lt.s32.totalorder %s168, 15
      %s170 = scalar_select %p169, %s168, 15
      %s171 = smul.addr %s170, 8
      %s172 = scalar_lea.vmem %s3, %s171
      %s173 = smul.u32 4, %s14
      %v174 = vld [vmem:[%s166] sm:$0xff]
      %v175 = vld [vmem:[%s166 + $0x8] sm:$0xff]
      %v176 = vld [vmem:[%s166 + $0x10] sm:$0xff]
      %v177 = vld [vmem:[%s166 + $0x18] sm:$0xff]
      %v178 = vld [vmem:[%s1] sm:$0xff]
      %v179 = vld [vmem:[%s1 + $0x8] sm:$0xff]
      %vm180 = vcmask 130048
      %v182 = vsel %vm180, %v174, 0
      %v185 = vsel %vm180, %v175, 0
      %v188 = vsel %vm180, %v176, 0
      %v191 = vsel %vm180, %v177, 0
      %193 = vmatprep.subr.mxu0 0.0
      %194 = vmatpush1.msra.mxu0 %v178
      %195 = vmatprep.subr.mxu0 0.0
      %196 = vmatpush1.msra.mxu0 %v179
      %197 = vmatprep.subr.mxu0 0.0
      %198 = vmatpush1.msra.mxu0 0.0
      %199 = vmatprep.subr.mxu0 0.0
      %200 = vmatpush1.msra.mxu0 0.0
      %201 = vmatprep.subr.mxu0 0.0
      %202 = vmatpush1.msra.mxu0 0.0
      %203 = vmatprep.subr.mxu0 0.0
      %204 = vmatpush1.msra.mxu0 0.0
      %205 = vmatprep.subr.mxu0 0.0
      %206 = vmatpush1.msra.mxu0 0.0
      %207 = vmatprep.subr.mxu0 0.0
      %208 = vmatpush1.msra.mxu0 0.0
      %209 = vmatprep.subr.mxu0 0.0
      %210 = vmatpush1.msra.mxu0 0.0
      %211 = vmatprep.subr.mxu0 0.0
      %212 = vmatpush1.msra.mxu0 0.0
      %213 = vmatprep.subr.mxu0 0.0
      %214 = vmatpush1.msra.mxu0 0.0
      %215 = vmatprep.subr.mxu0 0.0
      %216 = vmatpush1.msra.mxu0 0.0
      %217 = vmatprep.subr.mxu0 0.0
      %218 = vmatpush1.msra.mxu0 0.0
      %219 = vmatprep.subr.mxu0 0.0
      %220 = vmatpush1.msra.mxu0 0.0
      %221 = vmatprep.subr.mxu0 0.0
      %222 = vmatpush1.msra.mxu0 0.0
      %223 = vmatprep.subr.mxu0 0.0
      %224 = vmatpush1.msra.mxu0 0.0
      %225 = vmatprep.subr.mxu0 0.0
      %226 = vmatpush1.msra.mxu0 0.0
      %227 = vmatprep.subr.mxu0 0.0
      %228 = vmatpush1.msra.mxu0 0.0
      %229 = vmatprep.subr.mxu0 0.0
      %230 = vmatpush1.msra.mxu0 0.0
      %231 = vmatprep.subr.mxu0 0.0
      %232 = vmatpush1.msra.mxu0 0.0
      %233 = vmatprep.subr.mxu0 0.0
      %234 = vmatpush1.msra.mxu0 0.0
      %235 = vmatprep.subr.mxu0 0.0
      %236 = vmatpush1.msra.mxu0 0.0
      %237 = vmatprep.subr.mxu0 0.0
      %238 = vmatpush1.msra.mxu0 0.0
      %239 = vmatprep.subr.mxu0 0.0
      %240 = vmatpush1.msra.mxu0 0.0
      %241 = vmatprep.subr.mxu0 0.0
      %242 = vmatpush1.msra.mxu0 0.0
      %243 = vmatprep.subr.mxu0 0.0
      %244 = vmatpush1.msra.mxu0 0.0
      %245 = vmatprep.subr.mxu0 0.0
      %246 = vmatpush1.msra.mxu0 0.0
      %247 = vmatprep.subr.mxu0 0.0
      %248 = vmatpush1.msra.mxu0 0.0
      %249 = vmatprep.subr.mxu0 0.0
      %250 = vmatpush1.msra.mxu0 0.0
      %251 = vmatprep.subr.mxu0 0.0
      %252 = vmatpush1.msra.mxu0 0.0
      %253 = vmatprep.subr.mxu0 0.0
      %254 = vmatpush1.msra.mxu0 0.0
      %255 = vmatprep.subr.mxu0 0.0
      %256 = vmatpush1.msra.mxu0 0.0
      %257 = vmatprep.mubr.f32.mxu0 0.0
      %258 = vmatmul.mubr.f32.gmra.mrb[0].mxu0 %v182
      %v259 = vpop.f32.mrb[0].mxu0
      %v260 = vadd.f32 0.0, %v259
      %v261 = vpop.f32.mrb[0].mxu0
      %262 = vmatprep.mubr.f32.mxu0 0.0
      %263 = vmatmul.mubr.f32.gmra.mrb[0].mxu0 %v185
      %v264 = vpop.f32.mrb[0].mxu0
      %v265 = vadd.f32 0.0, %v264
      %v266 = vpop.f32.mrb[0].mxu0
      %267 = vmatprep.mubr.f32.mxu0 0.0
      %268 = vmatmul.mubr.f32.gmra.mrb[0].mxu0 %v188
      %v269 = vpop.f32.mrb[0].mxu0
      %v270 = vadd.f32 0.0, %v269
      %v271 = vpop.f32.mrb[0].mxu0
      %272 = vmatprep.mubr.f32.mxu0 0.0
      %273 = vmatmul.mubr.f32.gmra.mrb[0].mxu0 %v191
      %v274 = vpop.f32.mrb[0].mxu0
      %v275 = vadd.f32 0.0, %v274
      %v276 = vpop.f32.mrb[0].mxu0
      %277 = vdwg.mxu0
      %278 = vxpose.xlu0.b32.start [1/16] %v260, 128
      %279 = vxpose.xlu0.b32.cont [2/16] %v265, 128
      %280 = vxpose.xlu0.b32.cont [3/16] 0.0, 128
      %281 = vxpose.xlu0.b32.cont [4/16] 0.0, 128
      %282 = vxpose.xlu0.b32.cont [5/16] 0.0, 128
      %283 = vxpose.xlu0.b32.cont [6/16] 0.0, 128
      %284 = vxpose.xlu0.b32.cont [7/16] 0.0, 128
      %285 = vxpose.xlu0.b32.cont [8/16] 0.0, 128
      %286 = vxpose.xlu0.b32.cont [9/16] 0.0, 128
      %287 = vxpose.xlu0.b32.cont [10/16] 0.0, 128
      %288 = vxpose.xlu0.b32.cont [11/16] 0.0, 128
      %289 = vxpose.xlu0.b32.cont [12/16] 0.0, 128
      %290 = vxpose.xlu0.b32.cont [13/16] 0.0, 128
      %291 = vxpose.xlu0.b32.cont [14/16] 0.0, 128
      %292 = vxpose.xlu0.b32.cont [15/16] 0.0, 128
      %293 = vxpose.xlu0.b32.end [16/16] 0.0, 128
      %v294 = vpop.trf.xlu0
      %v295 = vpop.trf.xlu0
      %v296 = vpop.trf.xlu0
      %v297 = vpop.trf.xlu0
      %v298 = vpop.trf.xlu0
      %v299 = vpop.trf.xlu0
      %v300 = vpop.trf.xlu0
      %v301 = vpop.trf.xlu0
      %v302 = vpop.trf.xlu0
      %v303 = vpop.trf.xlu0
      %v304 = vpop.trf.xlu0
      %v305 = vpop.trf.xlu0
      %v306 = vpop.trf.xlu0
      %v307 = vpop.trf.xlu0
      %v308 = vpop.trf.xlu0
      %v309 = vpop.trf.xlu0
      %310 = vxpose.xlu0.b32.start [1/16] %v270, 128
      %311 = vxpose.xlu0.b32.cont [2/16] %v275, 128
      %312 = vxpose.xlu0.b32.cont [3/16] 0.0, 128
      %313 = vxpose.xlu0.b32.cont [4/16] 0.0, 128
      %314 = vxpose.xlu0.b32.cont [5/16] 0.0, 128
      %315 = vxpose.xlu0.b32.cont [6/16] 0.0, 128
      %316 = vxpose.xlu0.b32.cont [7/16] 0.0, 128
      %317 = vxpose.xlu0.b32.cont [8/16] 0.0, 128
      %318 = vxpose.xlu0.b32.cont [9/16] 0.0, 128
      %319 = vxpose.xlu0.b32.cont [10/16] 0.0, 128
      %320 = vxpose.xlu0.b32.cont [11/16] 0.0, 128
      %321 = vxpose.xlu0.b32.cont [12/16] 0.0, 128
      %322 = vxpose.xlu0.b32.cont [13/16] 0.0, 128
      %323 = vxpose.xlu0.b32.cont [14/16] 0.0, 128
      %324 = vxpose.xlu0.b32.cont [15/16] 0.0, 128
      %325 = vxpose.xlu0.b32.end [16/16] 0.0, 128
      %v326 = vpop.trf.xlu0
      %v327 = vpop.trf.xlu0
      %v328 = vpop.trf.xlu0
      %v329 = vpop.trf.xlu0
      %v330 = vpop.trf.xlu0
      %v331 = vpop.trf.xlu0
      %v332 = vpop.trf.xlu0
      %v333 = vpop.trf.xlu0
      %v334 = vpop.trf.xlu0
      %v335 = vpop.trf.xlu0
      %v336 = vpop.trf.xlu0
      %v337 = vpop.trf.xlu0
      %v338 = vpop.trf.xlu0
      %v339 = vpop.trf.xlu0
      %v340 = vpop.trf.xlu0
      %v341 = vpop.trf.xlu0
      %v342 = vld [vmem:[%s2] sm:$0xff]
      %v343 = vld [vmem:[%s2 + $0x8] sm:$0xff]
      %v345 = vsel %vm180, %v294, 0
      %v348 = vsel %vm180, %v295, 0
      %v351 = vsel %vm180, %v326, 0
      %v354 = vsel %vm180, %v327, 0
      %356 = vmatprep.subr.mxu0 0.0
      %357 = vmatpush1.msra.mxu0 %v342
      %358 = vmatprep.subr.mxu0 0.0
      %359 = vmatpush1.msra.mxu0 %v343
      %360 = vmatprep.subr.mxu0 0.0
      %361 = vmatpush1.msra.mxu0 0.0
      %362 = vmatprep.subr.mxu0 0.0
      %363 = vmatpush1.msra.mxu0 0.0
      %364 = vmatprep.subr.mxu0 0.0
      %365 = vmatpush1.msra.mxu0 0.0
      %366 = vmatprep.subr.mxu0 0.0
      %367 = vmatpush1.msra.mxu0 0.0
      %368 = vmatprep.subr.mxu0 0.0
      %369 = vmatpush1.msra.mxu0 0.0
      %370 = vmatprep.subr.mxu0 0.0
      %371 = vmatpush1.msra.mxu0 0.0
      %372 = vmatprep.subr.mxu0 0.0
      %373 = vmatpush1.msra.mxu0 0.0
      %374 = vmatprep.subr.mxu0 0.0
      %375 = vmatpush1.msra.mxu0 0.0
      %376 = vmatprep.subr.mxu0 0.0
      %377 = vmatpush1.msra.mxu0 0.0
      %378 = vmatprep.subr.mxu0 0.0
      %379 = vmatpush1.msra.mxu0 0.0
      %380 = vmatprep.subr.mxu0 0.0
      %381 = vmatpush1.msra.mxu0 0.0
      %382 = vmatprep.subr.mxu0 0.0
      %383 = vmatpush1.msra.mxu0 0.0
      %384 = vmatprep.subr.mxu0 0.0
      %385 = vmatpush1.msra.mxu0 0.0
      %386 = vmatprep.subr.mxu0 0.0
      %387 = vmatpush1.msra.mxu0 0.0
      %388 = vmatprep.subr.mxu0 0.0
      %389 = vmatpush1.msra.mxu0 0.0
      %390 = vmatprep.subr.mxu0 0.0
      %391 = vmatpush1.msra.mxu0 0.0
      %392 = vmatprep.subr.mxu0 0.0
      %393 = vmatpush1.msra.mxu0 0.0
      %394 = vmatprep.subr.mxu0 0.0
      %395 = vmatpush1.msra.mxu0 0.0
      %396 = vmatprep.subr.mxu0 0.0
      %397 = vmatpush1.msra.mxu0 0.0
      %398 = vmatprep.subr.mxu0 0.0
      %399 = vmatpush1.msra.mxu0 0.0
      %400 = vmatprep.subr.mxu0 0.0
      %401 = vmatpush1.msra.mxu0 0.0
      %402 = vmatprep.subr.mxu0 0.0
      %403 = vmatpush1.msra.mxu0 0.0
      %404 = vmatprep.subr.mxu0 0.0
      %405 = vmatpush1.msra.mxu0 0.0
      %406 = vmatprep.subr.mxu0 0.0
      %407 = vmatpush1.msra.mxu0 0.0
      %408 = vmatprep.subr.mxu0 0.0
      %409 = vmatpush1.msra.mxu0 0.0
      %410 = vmatprep.subr.mxu0 0.0
      %411 = vmatpush1.msra.mxu0 0.0
      %412 = vmatprep.subr.mxu0 0.0
      %413 = vmatpush1.msra.mxu0 0.0
      %414 = vmatprep.subr.mxu0 0.0
      %415 = vmatpush1.msra.mxu0 0.0
      %416 = vmatprep.subr.mxu0 0.0
      %417 = vmatpush1.msra.mxu0 0.0
      %418 = vmatprep.subr.mxu0 0.0
      %419 = vmatpush1.msra.mxu0 0.0
      %420 = vmatprep.mubr.f32.mxu0 0.0
      %421 = vmatmul.mubr.f32.gmra.mrb[0].mxu0 %v345
      %v422 = vpop.f32.mrb[0].mxu0
      %v423 = vadd.f32 0.0, %v422
      %v424 = vpop.f32.mrb[0].mxu0
      %425 = vmatprep.mubr.f32.mxu0 0.0
      %426 = vmatmul.mubr.f32.gmra.mrb[0].mxu0 %v348
      %v427 = vpop.f32.mrb[0].mxu0
      %v428 = vadd.f32 0.0, %v427
      %v429 = vpop.f32.mrb[0].mxu0
      %430 = vmatprep.mubr.f32.mxu0 0.0
      %431 = vmatmul.mubr.f32.gmra.mrb[0].mxu0 %v351
      %v432 = vpop.f32.mrb[0].mxu0
      %v433 = vadd.f32 0.0, %v432
      %v434 = vpop.f32.mrb[0].mxu0
      %435 = vmatprep.mubr.f32.mxu0 0.0
      %436 = vmatmul.mubr.f32.gmra.mrb[0].mxu0 %v354
      %v437 = vpop.f32.mrb[0].mxu0
      %v438 = vadd.f32 0.0, %v437
      %v439 = vpop.f32.mrb[0].mxu0
      %440 = vdwg.mxu0
      %vm441 = vcmask 97280
      %442 = vst.msk [vmem:[%s172] sm:$0xff] %vm441, %v423
      %443 = vst.msk [vmem:[%s172 + $0x8] sm:$0xff] %vm441, %v428
      %444 = vst.msk [vmem:[%s172 + $0x10] sm:$0xff] %vm441, %v433
      %445 = vst.msk [vmem:[%s172 + $0x18] sm:$0xff] %vm441, %v438
      %s446 = smul.u32 4, %s14
      %p447 = scmp.lt.s32.totalorder %s446, 15
      %s448 = scalar_select %p447, %s446, 15
      %s449 = smul.addr %s448, 8
      %s450 = scalar_lea.vmem %s3, %s449
      // Predicated region
      $region33: #{tpu_custom_call.1} parent=31 // pred_check
        %p451 = pneg %p100
      $region34: #{tpu_custom_call.1} parent=31 // pred_check_branch
        %453 = sbr.rel (%p451) target = $region36
      $region35: #{tpu_custom_call.1} parent=31 // pred_region
        %s454 = smul.u32 4, %s14
      $region36: #{tpu_custom_call.1} parent=31 // pred_fallthru
        _
    $region32: #{tpu_custom_call.1} parent=5 // pred_fallthru
      _
    %p455 = scmp.le.s32.totalorder 2, %s9
    // Predicated region
    $region37: #{tpu_custom_call.1} parent=5 // pred_check
      %p456 = pneg %p455
    $region38: #{tpu_custom_call.1} parent=5 // pred_check_branch
      %458 = sbr.rel (%p456) target = $region40
    $region39: #{tpu_custom_call.1} parent=5 // pred_region
      %s459 = ssub.s32 %s9, 2
      // Predicated region
      $region41: #{tpu_custom_call.1} parent=39 // pred_check
        %p460 = pneg %p106
      $region42: #{tpu_custom_call.1} parent=39 // pred_check_branch
        %462 = sbr.rel (%p460) target = $region44
      $region43: #{tpu_custom_call.1} parent=39 // pred_region
        %s463 = smul.u32 4, %s15
        %p464 = scmp.lt.s32.totalorder %s463, 15
        %s465 = scalar_select %p464, %s463, 15
        %s466 = smul.addr %s465, 8
        %s467 = scalar_lea.vmem %s3, %s466
      $region44: #{tpu_custom_call.1} parent=39 // pred_fallthru
        _
    $region40: #{tpu_custom_call.1} parent=5 // pred_fallthru
      _
  $region6: #{tpu_custom_call.1} parent=0 // loop_footer
    %s13 = sadd.s32 1, %s9
  $region7: #{tpu_custom_call.1} parent=0 // loop_footer_branch
    %8 = sbr.rel target = $region3
  $region8: #{tpu_custom_call.1} parent=0 // loop_exit
    _

</llo_original>
